<compile_context>
chip_gen: v5e
topology: v5e:2x2
jax: 0.10.0
libtpu: 0.0.40
codegen_flags: <defaults>
</compile_context>

<pallas_src>
import functools

import jax
import jax.numpy as jnp
from jax.experimental import pallas as pl
from jax.experimental.pallas import tpu as pltpu


# ---------------------------------------------------------------------------
# Fused single-pass kernel (default path).
# ---------------------------------------------------------------------------
def _se_fused_kernel(x_ref, w1t_ref, b1_ref, w2t_ref, b2_ref, o_ref, *, inv_hw):
    """One grid step processes a (Nb, C, HWp) slab of the batch."""
    # --- squeeze: global average pool, f32 accumulation (no f32 slab copy) --
    pooled = jnp.sum(x_ref[...], axis=2, dtype=jnp.float32) * inv_hw       # (Nb, C)

    # --- excitation: tiny batched matmuls, entirely under HBM-DMA slack ----
    h = jnp.dot(pooled, w1t_ref[...], preferred_element_type=jnp.float32) + b1_ref[...]
    h = jnp.maximum(h, 0.0)                                                 # (Nb, SE)
    s = jnp.dot(h, w2t_ref[...], preferred_element_type=jnp.float32) + b2_ref[...]
    s = jax.nn.sigmoid(s)                                                   # (Nb, C)

    # --- scale: re-read the slab from the ref (short live range) and gate in
    # f32; the downcast is fused into the store.
    o_ref[...] = (x_ref[...].astype(jnp.float32) * s[:, :, None]).astype(o_ref.dtype)


# ---------------------------------------------------------------------------
# Fallback kernels: two-phase pool-then-scale when one row exceeds VMEM.
# ---------------------------------------------------------------------------
def _pool_kernel(x_ref, sum_ref):
    part = jnp.sum(x_ref[...], axis=2, keepdims=True, dtype=jnp.float32)    # (1, C, 1)

    @pl.when(pl.program_id(1) == 0)
    def _():
        sum_ref[...] = part

    @pl.when(pl.program_id(1) > 0)
    def _():
        sum_ref[...] += part


def _scale_kernel(x_ref, g_ref, o_ref):
    o_ref[...] = (x_ref[...].astype(jnp.float32) * g_ref[...]).astype(o_ref.dtype)


# ---------------------------------------------------------------------------
# Wrapper.
# ---------------------------------------------------------------------------
def _vmem_capacity_bytes():
    try:
        return int(pltpu.get_tpu_info().vmem_capacity_bytes)
    except Exception:  # pragma: no cover - conservative: v7x per-TC VMEM
        return 64 * 1024 * 1024


def _cdiv(a, b):
    return -(-a // b)


def _round_up(x, m):
    return _cdiv(x, m) * m


def se_forward(x_nchw, w1, b1, w2, b2):
    """x_nchw: (N, C, H, W); w1: (SE, C); b1: (SE,); w2: (C, SE); b2: (C,)."""
    N, C, H, W = x_nchw.shape
    HW = H * W
    SE_CH = w1.shape[0]
    dtype = x_nchw.dtype
    itemsize = jnp.dtype(dtype).itemsize

    # Pre-transpose 1x1-conv weights -> plain row-major matmuls in-kernel.
    w1_t = jnp.asarray(w1, jnp.float32).T                     # (C, SE)
    w2_t = jnp.asarray(w2, jnp.float32).T                     # (SE, C)
    b1_row = jnp.asarray(b1, jnp.float32).reshape(1, SE_CH)
    b2_row = jnp.asarray(b2, jnp.float32).reshape(1, C)

    # Lane density: pad spatial to a multiple of 128 (zeros don't change the sum).
    HW_pad = _round_up(HW, 128)

    vmem_bytes = _vmem_capacity_bytes()
    slab_budget = (vmem_bytes * 7) // 16        # ~56 MiB @128 MiB VMEM, ~28 MiB @64 MiB
    per_row = 4 * C * HW_pad * itemsize         # double-buffered in + out per batch row
    weight_bytes = 4 * (2 * C * SE_CH + SE_CH + C)

    x_flat = x_nchw.reshape(N, C, HW)

    if per_row <= slab_budget:
        # ----------------- fused single-pass path --------------------------
        nb_max = max(1, slab_budget // per_row)
        min_steps = min(N, 4)                   # pipeline depth + v7x megacore balance
        num_steps = max(_cdiv(N, nb_max), min_steps)
        if num_steps % 2 and num_steps < N:
            num_steps += 1                      # even step count -> balanced across 2 TCs
        Nb = _cdiv(N, num_steps)
        grid_steps = _cdiv(N, Nb)               # ceil split: no 1-row-block collapse

        if HW_pad != HW:
            x_flat = jnp.pad(x_flat, ((0, 0), (0, 0), (0, HW_pad - HW)))

        footprint = 4 * Nb * C * HW_pad * itemsize + 2 * weight_bytes
        vmem_limit = int(min(vmem_bytes,
                             max(footprint + footprint // 4, 8 * 1024 * 1024)))

        cost = pl.CostEstimate(
            flops=3 * N * C * HW + 4 * N * C * SE_CH,
            transcendentals=N * C,
            bytes_accessed=2 * N * C * HW_pad * itemsize + weight_bytes,
        )

        kernel = functools.partial(_se_fused_kernel, inv_hw=1.0 / float(HW))

        out_flat = pl.pallas_call(
            kernel,
            out_shape=jax.ShapeDtypeStruct((N, C, HW_pad), dtype),
            grid_spec=pltpu.PrefetchScalarGridSpec(
                num_scalar_prefetch=0,
                grid=(grid_steps,),
                in_specs=[
                    pl.BlockSpec((Nb, C, HW_pad), lambda n: (n, 0, 0)),   # x slab
                    pl.BlockSpec((C, SE_CH), lambda n: (0, 0)),           # w1^T
                    pl.BlockSpec((1, SE_CH), lambda n: (0, 0)),           # b1 row
                    pl.BlockSpec((SE_CH, C), lambda n: (0, 0)),           # w2^T
                    pl.BlockSpec((1, C), lambda n: (0, 0)),               # b2 row
                ],
                out_specs=pl.BlockSpec((Nb, C, HW_pad), lambda n: (n, 0, 0)),
            ),
            compiler_params=pltpu.CompilerParams(
                dimension_semantics=("parallel",),
                vmem_limit_bytes=vmem_limit,
            ),
            cost_estimate=cost,
        )(x_flat, w1_t, b1_row, w2_t, b2_row)

        if HW_pad != HW:
            out_flat = out_flat[:, :, :HW]
        return out_flat.reshape(N, C, H, W)

    # --------------------- fallback: tile the spatial axis ------------------
    # A single batch row does not fit the VMEM budget (huge C*HW): two-phase
    # pool-then-scale. Costs a second HBM read of x but keeps tiles in budget.
    hw_t = max(128, (slab_budget // (4 * C * itemsize)) // 128 * 128)
    n_hw = _cdiv(HW, hw_t)
    hw_t = _round_up(_cdiv(HW, n_hw), 128)      # balance chunks, minimize padding
    HW_pad2 = hw_t * n_hw

    if HW_pad2 != HW:
        x_flat = jnp.pad(x_flat, ((0, 0), (0, 0), (0, HW_pad2 - HW)))

    tile_fp = 4 * C * hw_t * itemsize + 4 * C * 4
    vmem_limit = int(min(vmem_bytes, max(tile_fp + tile_fp // 4, 8 * 1024 * 1024)))

    sums = pl.pallas_call(
        _pool_kernel,
        out_shape=jax.ShapeDtypeStruct((N, C, 1), jnp.float32),
        grid_spec=pltpu.PrefetchScalarGridSpec(
            num_scalar_prefetch=0,
            grid=(N, n_hw),
            in_specs=[pl.BlockSpec((1, C, hw_t), lambda n, h: (n, 0, h))],
            out_specs=pl.BlockSpec((1, C, 1), lambda n, h: (n, 0, 0)),
        ),
        compiler_params=pltpu.CompilerParams(
            dimension_semantics=("parallel", "arbitrary"),
            vmem_limit_bytes=vmem_limit,
        ),
    )(x_flat)

    pooled = sums[:, :, 0] * (1.0 / float(HW))                 # (N, C) f32
    h = jnp.maximum(pooled @ w1_t + b1_row, 0.0)
    gate = jax.nn.sigmoid(h @ w2_t + b2_row)                   # (N, C) f32
    gate3 = gate[:, :, None]                                   # (N, C, 1)

    out_flat = pl.pallas_call(
        _scale_kernel,
        out_shape=jax.ShapeDtypeStruct((N, C, HW_pad2), dtype),
        grid_spec=pltpu.PrefetchScalarGridSpec(
            num_scalar_prefetch=0,
            grid=(N, n_hw),
            in_specs=[pl.BlockSpec((1, C, hw_t), lambda n, h: (n, 0, h)),
                      pl.BlockSpec((1, C, 1), lambda n, h: (n, 0, 0))],
            out_specs=pl.BlockSpec((1, C, hw_t), lambda n, h: (n, 0, h)),
        ),
        compiler_params=pltpu.CompilerParams(
            dimension_semantics=("parallel", "parallel"),
            vmem_limit_bytes=vmem_limit,
        ),
    )(x_flat, gate3)

    return out_flat[:, :, :HW].reshape(N, C, H, W)


def se_reference(x_nchw, w1, b1, w2, b2):
    """Pure-JAX reference mirroring the PyTorch forward."""
    xf = x_nchw.astype(jnp.float32)
    pooled = jnp.mean(xf, axis=(2, 3))                        # (N, C)
    h = jnp.maximum(pooled @ w1.T + b1, 0.0)                  # (N, SE)
    s = jax.nn.sigmoid(h @ w2.T + b2)                         # (N, C)
    return (xf * s[:, :, None, None]).astype(x_nchw.dtype)


if __name__ == "__main__":
    # Module config (synthetic): in_channels = out_channels = 8, se_ratio = 0.25
    in_channels = 8
    out_channels = 8          # must equal in_channels for `out * x` to broadcast
    se_ratio = 0.25
    se_channels = int(round(in_channels * se_ratio))

    N, H, W = 2, 16, 16

    key = jax.random.PRNGKey(0)
    kx, k1, k2, k3, k4 = jax.random.split(key, 5)

    x = jax.random.normal(kx, (N, in_channels, H, W), dtype=jnp.float32)
    # 1x1 conv weights squeezed to 2-D matrices (as in the PyTorch module).
    w1 = 0.1 * jax.random.normal(k1, (se_channels, in_channels), dtype=jnp.float32)
    b1 = 0.1 * jax.random.normal(k2, (se_channels,), dtype=jnp.float32)
    w2 = 0.1 * jax.random.normal(k3, (out_channels, se_channels), dtype=jnp.float32)
    b2 = 0.1 * jax.random.normal(k4, (out_channels,), dtype=jnp.float32)

    out = se_forward(x, w1, b1, w2, b2)
    jax.block_until_ready(out)

    ref = se_reference(x, w1, b1, w2, b2)
    assert out.shape == (N, in_channels, H, W)
    assert jnp.allclose(out, ref, atol=1e-5, rtol=1e-5)

    print("KERNEL_OK")
</pallas_src>

<mosaic_0001>
module attributes {stable_mosaic.version = 11 : i64} {
  func.func @_se_fused_kernel(%arg0: i32, %arg1: memref<1x8x256xf32, #tpu.memory_space<vmem>>, %arg2: memref<8x2xf32, #tpu.memory_space<vmem>>, %arg3: memref<1x2xf32, #tpu.memory_space<vmem>>, %arg4: memref<2x8xf32, #tpu.memory_space<vmem>>, %arg5: memref<1x8xf32, #tpu.memory_space<vmem>>, %arg6: memref<1x8x256xf32, #tpu.memory_space<vmem>>) attributes {dimension_semantics = [#tpu.dimension_semantics<parallel>], iteration_bounds = array<i64: 2>, scalar_prefetch = 0 : i64, scratch_operands = 0 : i64, tpu.core_type = #tpu.core_type<tc>, window_params = [{transform_indices = @transform_0, window_bounds = array<i64: 1, 8, 256>}, {pipeline_mode = #tpu.pipeline_mode<synchronous>, transform_indices = @transform_1, window_bounds = array<i64: 8, 2>}, {pipeline_mode = #tpu.pipeline_mode<synchronous>, transform_indices = @transform_2, window_bounds = array<i64: 1, 2>}, {pipeline_mode = #tpu.pipeline_mode<synchronous>, transform_indices = @transform_3, window_bounds = array<i64: 2, 8>}, {pipeline_mode = #tpu.pipeline_mode<synchronous>, transform_indices = @transform_4, window_bounds = array<i64: 1, 8>}, {transform_indices = @transform_5, window_bounds = array<i64: 1, 8, 256>}]} {
    %c0 = arith.constant 0 : index
    %c0_0 = arith.constant 0 : index
    %c0_1 = arith.constant 0 : index
    %0 = vector.load %arg1[%c0, %c0_0, %c0_1] : memref<1x8x256xf32, #tpu.memory_space<vmem>>, vector<1x8x256xf32>
    %cst = arith.constant dense<0.000000e+00> : vector<1x8xf32>
    %1 = vector.multi_reduction <add>, %0, %cst [2] : vector<1x8x256xf32> to vector<1x8xf32>
    %cst_2 = arith.constant 3.906250e-03 : f32
    %2 = vector.broadcast %cst_2 : f32 to vector<1x8xf32>
    %3 = arith.mulf %1, %2 : vector<1x8xf32>
    %c0_3 = arith.constant 0 : index
    %c0_4 = arith.constant 0 : index
    %4 = vector.load %arg2[%c0_3, %c0_4] : memref<8x2xf32, #tpu.memory_space<vmem>>, vector<8x2xf32>
    %cst_5 = arith.constant dense<0.000000e+00> : vector<1x2xf32>
    %5 = tpu.matmul %3, %4, %cst_5 {dimension_numbers = #tpu.dot_dimension_numbers<[1], [0], [0], [1], [0, 0, 1, 1], [], []>} : vector<1x8xf32>, vector<8x2xf32>, vector<1x2xf32> -> vector<1x2xf32>
    %c0_6 = arith.constant 0 : index
    %c0_7 = arith.constant 0 : index
    %6 = vector.load %arg3[%c0_6, %c0_7] : memref<1x2xf32, #tpu.memory_space<vmem>>, vector<1x2xf32>
    %7 = arith.addf %5, %6 : vector<1x2xf32>
    %cst_8 = arith.constant 0.000000e+00 : f32
    %8 = vector.broadcast %cst_8 : f32 to vector<1x2xf32>
    %9 = arith.maximumf %7, %8 : vector<1x2xf32>
    %c0_9 = arith.constant 0 : index
    %c0_10 = arith.constant 0 : index
    %10 = vector.load %arg4[%c0_9, %c0_10] : memref<2x8xf32, #tpu.memory_space<vmem>>, vector<2x8xf32>
    %cst_11 = arith.constant dense<0.000000e+00> : vector<1x8xf32>
    %11 = tpu.matmul %9, %10, %cst_11 {dimension_numbers = #tpu.dot_dimension_numbers<[1], [0], [0], [1], [0, 0, 1, 1], [], []>} : vector<1x2xf32>, vector<2x8xf32>, vector<1x8xf32> -> vector<1x8xf32>
    %c0_12 = arith.constant 0 : index
    %c0_13 = arith.constant 0 : index
    %12 = vector.load %arg5[%c0_12, %c0_13] : memref<1x8xf32, #tpu.memory_space<vmem>>, vector<1x8xf32>
    %13 = arith.addf %11, %12 : vector<1x8xf32>
    %14 = arith.negf %13 : vector<1x8xf32>
    %15 = math.exp %14 : vector<1x8xf32>
    %cst_14 = arith.constant 1.000000e+00 : f32
    %16 = vector.broadcast %cst_14 : f32 to vector<1x8xf32>
    %17 = arith.addf %16, %15 : vector<1x8xf32>
    %18 = arith.divf %16, %17 : vector<1x8xf32>
    %c0_15 = arith.constant 0 : index
    %c0_16 = arith.constant 0 : index
    %c0_17 = arith.constant 0 : index
    %19 = vector.load %arg1[%c0_15, %c0_16, %c0_17] : memref<1x8x256xf32, #tpu.memory_space<vmem>>, vector<1x8x256xf32>
    %20 = vector.shape_cast %18 : vector<1x8xf32> to vector<1x8x1xf32>
    %21 = vector.broadcast %20 : vector<1x8x1xf32> to vector<1x8x256xf32>
    %22 = arith.mulf %19, %21 : vector<1x8x256xf32>
    %c0_18 = arith.constant 0 : index
    %c0_19 = arith.constant 0 : index
    %c0_20 = arith.constant 0 : index
    %23 = vector.load %arg6[%c0_18, %c0_19, %c0_20] : memref<1x8x256xf32, #tpu.memory_space<vmem>>, vector<1x8x256xf32>
    tpu.vector_store %arg6[%c0_18, %c0_19, %c0_20], %22 {strides = array<i32>} : memref<1x8x256xf32, #tpu.memory_space<vmem>>, vector<1x8x256xf32>,
    return
  }
  func.func @transform_0(%arg0: i32) -> (i32, i32, i32) {
    %c0_i32 = arith.constant 0 : i32
    %c0_i32_0 = arith.constant 0 : i32
    %c0_i32_1 = arith.constant 0 : i32
    return %arg0, %c0_i32, %c0_i32_0 : i32, i32, i32
  }
  func.func @transform_1(%arg0: i32) -> (i32, i32) {
    %c0_i32 = arith.constant 0 : i32
    %c0_i32_0 = arith.constant 0 : i32
    %c0_i32_1 = arith.constant 0 : i32
    return %c0_i32, %c0_i32_0 : i32, i32
  }
  func.func @transform_2(%arg0: i32) -> (i32, i32) {
    %c0_i32 = arith.constant 0 : i32
    %c0_i32_0 = arith.constant 0 : i32
    %c0_i32_1 = arith.constant 0 : i32
    return %c0_i32, %c0_i32_0 : i32, i32
  }
  func.func @transform_3(%arg0: i32) -> (i32, i32) {
    %c0_i32 = arith.constant 0 : i32
    %c0_i32_0 = arith.constant 0 : i32
    %c0_i32_1 = arith.constant 0 : i32
    return %c0_i32, %c0_i32_0 : i32, i32
  }
  func.func @transform_4(%arg0: i32) -> (i32, i32) {
    %c0_i32 = arith.constant 0 : i32
    %c0_i32_0 = arith.constant 0 : i32
    %c0_i32_1 = arith.constant 0 : i32
    return %c0_i32, %c0_i32_0 : i32, i32
  }
  func.func @transform_5(%arg0: i32) -> (i32, i32, i32) {
    %c0_i32 = arith.constant 0 : i32
    %c0_i32_0 = arith.constant 0 : i32
    %c0_i32_1 = arith.constant 0 : i32
    return %arg0, %c0_i32, %c0_i32_0 : i32, i32, i32
  }
}

</mosaic_0001>

<llo_original>
// kernel: tpu_custom_call.1
$region0: #{tpu_custom_call.1}
  #allocation0 [shape = 'u32[]', space=smem, size = 0x4, offset = 0x4, fixed_abs, tag = 'smem constant byte address 0x4 - core index']
  #allocation1 [shape = 'u32[72,128]{1,0:T(1,128)}', space=vmem, size = 0x9000, scoped, tag = 'internal scratch']
  %s0 = inlined_call_operand.hbm [shape: f32[2,8,256], index: 0, kind: input, shape index: {}]
  %s1 = inlined_call_operand.vmem [shape: f32[8,2], index: 1, kind: input, shape index: {}]
  %s2 = inlined_call_operand.vmem [shape: f32[1,2], index: 2, kind: input, shape index: {}]
  %s3 = inlined_call_operand.vmem [shape: f32[2,8], index: 3, kind: input, shape index: {}]
  %s4 = inlined_call_operand.vmem [shape: f32[1,8], index: 4, kind: input, shape index: {}]
  %s5 = inlined_call_operand.hbm [shape: f32[2,8,256], index: 5, kind: output, shape index: {}]
  %s6 = sld [smem:[#allocation0]]
  $region57: #{tpu_custom_call.1} parent=0
    _
  %s8 = ssub.s32 1, %s6
  %s9 = scalar_select 0, %s8, %s6
  $region1: #{tpu_custom_call.1} parent=0
    #allocation2 [shape = 'u8[16384]{0}', space=vmem, size = 0x4000, scoped, tag = 'input window, operand 0']
    #allocation3 [shape = 's32[2]{0}', space=sflag, size = 0x8, scoped, tag = 'scoped memory for tpu_custom_call.1']
    #allocation4 [shape = 's32[2]{0}', space=sflag, size = 0x8, scoped, tag = 'scoped memory for tpu_custom_call.1']
    #allocation5 [shape = 'u8[16384]{0}', space=vmem, size = 0x4000, scoped, tag = 'output window, operand 0']
    %10 = vsyncpa [#allocation3], 0
    %s11 = scalar_lea.sflag [#allocation3], 1
    %12 = vsyncpa %s11, 0
    %13 = vsyncpa [#allocation4], 0
    %s14 = scalar_lea.sflag [#allocation4], 1
    %15 = vsyncpa %s14, 0
    loop: start=0, step=1, limit=4
    $region2: #{tpu_custom_call.1} parent=1 // loop_pre_header
      _
    $region3: #{tpu_custom_call.1} parent=1 // loop_header
      %s17 = sphi 0, %s21
      %p18 = scmp.ge.s32.totalorder %s17, 4
      %s27 = sphi 0, %s29
      %s30 = sphi 0, %s27
      %s31 = sphi 0, %s30
      %s47 = sphi 0, %s31
      %s51 = sphi 0, %s51
      %s53 = sphi 0, %s51
      %s54 = sphi 0, %s53
      %s68 = sphi 0, %s54
      %s72 = sphi 0, %s72
      %s74 = sphi 0, %s72
      %s75 = sphi 0, %s74
      %s89 = sphi 0, %s75
      %s93 = sphi 0, %s93
      %s95 = sphi 0, %s93
      %s96 = sphi 0, %s95
      %s110 = sphi 0, %s96
      %s114 = sphi 0, %s114
      %s116 = sphi 0, %s114
      %s117 = sphi 0, %s116
      %s131 = sphi 0, %s117
      %s137 = sphi 0, %s139
      %s140 = sphi 0, %s137
      %s141 = sphi 0, %s140
      %s157 = sphi 0, %s141
    $region4: #{tpu_custom_call.1} parent=1 // loop_header_branch
      %20 = sbr.rel (%p18) target = $region8
    $region5: #{tpu_custom_call.1} parent=1 // loop_body
      %s22 = ssub.s32 %s17, 1
      %s23 = ssub.s32 %s17, 2
      %s24 = sadd.s32 %s17, 1
      %s25 = ssub.s32 %s17, %s24
      %p26 = scmp.eq.s32.totalorder %s25, 0
      %s28 = sadd.s32 %s27, 1
      %s29 = scalar_select %p26, %s27, %s28
      %p32 = pneg %p26
      %p33 = scmp.eq.s32.totalorder %s17, 1
      %p34 = por %p32, %p33
      %p35 = scmp.ne.s32.totalorder %s27, %s30
      %p36 = scmp.eq.s32.totalorder %s17, 0
      %p37 = por %p35, %p36
      %p38 = scmp.ne.s32.totalorder %s27, %s30
      %p39 = scmp.eq.s32.totalorder %s22, 1
      %p40 = por %p38, %p39
      %p41 = scmp.ne.s32.totalorder %s30, %s31
      %p42 = scmp.eq.s32.totalorder %s22, 0
      %p43 = por %p41, %p42
      %p44 = scmp.ne.s32.totalorder %s30, %s31
      %p45 = scmp.eq.s32.totalorder %s23, 1
      %p46 = por %p44, %p45
      %p48 = scmp.ne.s32.totalorder %s31, %s47
      %p49 = scmp.eq.s32.totalorder %s23, 0
      %p50 = por %p48, %p49
      %s52 = sadd.s32 %s51, 1
      %p55 = scmp.eq.s32.totalorder %s17, 1
      %p56 = scmp.ne.s32.totalorder %s51, %s53
      %p57 = scmp.eq.s32.totalorder %s17, 0
      %p58 = por %p56, %p57
      %p59 = scmp.ne.s32.totalorder %s51, %s53
      %p60 = scmp.eq.s32.totalorder %s22, 1
      %p61 = por %p59, %p60
      %p62 = scmp.ne.s32.totalorder %s53, %s54
      %p63 = scmp.eq.s32.totalorder %s22, 0
      %p64 = por %p62, %p63
      %p65 = scmp.ne.s32.totalorder %s53, %s54
      %p66 = scmp.eq.s32.totalorder %s23, 1
      %p67 = por %p65, %p66
      %p69 = scmp.ne.s32.totalorder %s54, %s68
      %p70 = scmp.eq.s32.totalorder %s23, 0
      %p71 = por %p69, %p70
      %s73 = sadd.s32 %s72, 1
      %p76 = scmp.eq.s32.totalorder %s17, 1
      %p77 = scmp.ne.s32.totalorder %s72, %s74
      %p78 = scmp.eq.s32.totalorder %s17, 0
      %p79 = por %p77, %p78
      %p80 = scmp.ne.s32.totalorder %s72, %s74
      %p81 = scmp.eq.s32.totalorder %s22, 1
      %p82 = por %p80, %p81
      %p83 = scmp.ne.s32.totalorder %s74, %s75
      %p84 = scmp.eq.s32.totalorder %s22, 0
      %p85 = por %p83, %p84
      %p86 = scmp.ne.s32.totalorder %s74, %s75
      %p87 = scmp.eq.s32.totalorder %s23, 1
      %p88 = por %p86, %p87
      %p90 = scmp.ne.s32.totalorder %s75, %s89
      %p91 = scmp.eq.s32.totalorder %s23, 0
      %p92 = por %p90, %p91
      %s94 = sadd.s32 %s93, 1
      %p97 = scmp.eq.s32.totalorder %s17, 1
      %p98 = scmp.ne.s32.totalorder %s93, %s95
      %p99 = scmp.eq.s32.totalorder %s17, 0
      %p100 = por %p98, %p99
      %p101 = scmp.ne.s32.totalorder %s93, %s95
      %p102 = scmp.eq.s32.totalorder %s22, 1
      %p103 = por %p101, %p102
      %p104 = scmp.ne.s32.totalorder %s95, %s96
      %p105 = scmp.eq.s32.totalorder %s22, 0
      %p106 = por %p104, %p105
      %p107 = scmp.ne.s32.totalorder %s95, %s96
      %p108 = scmp.eq.s32.totalorder %s23, 1
      %p109 = por %p107, %p108
      %p111 = scmp.ne.s32.totalorder %s96, %s110
      %p112 = scmp.eq.s32.totalorder %s23, 0
      %p113 = por %p111, %p112
      %s115 = sadd.s32 %s114, 1
      %p118 = scmp.eq.s32.totalorder %s17, 1
      %p119 = scmp.ne.s32.totalorder %s114, %s116
      %p120 = scmp.eq.s32.totalorder %s17, 0
      %p121 = por %p119, %p120
      %p122 = scmp.ne.s32.totalorder %s114, %s116
      %p123 = scmp.eq.s32.totalorder %s22, 1
      %p124 = por %p122, %p123
      %p125 = scmp.ne.s32.totalorder %s116, %s117
      %p126 = scmp.eq.s32.totalorder %s22, 0
      %p127 = por %p125, %p126
      %p128 = scmp.ne.s32.totalorder %s116, %s117
      %p129 = scmp.eq.s32.totalorder %s23, 1
      %p130 = por %p128, %p129
      %p132 = scmp.ne.s32.totalorder %s117, %s131
      %p133 = scmp.eq.s32.totalorder %s23, 0
      %p134 = por %p132, %p133
      %s135 = ssub.s32 %s17, %s24
      %p136 = scmp.eq.s32.totalorder %s135, 0
      %s138 = sadd.s32 %s137, 1
      %s139 = scalar_select %p136, %s137, %s138
      %p142 = pneg %p136
      %p143 = scmp.eq.s32.totalorder %s17, 1
      %p144 = por %p142, %p143
      %p145 = scmp.ne.s32.totalorder %s137, %s140
      %p146 = scmp.eq.s32.totalorder %s17, 0
      %p147 = por %p145, %p146
      %p148 = scmp.ne.s32.totalorder %s137, %s140
      %p149 = scmp.eq.s32.totalorder %s22, 1
      %p150 = por %p148, %p149
      %p151 = scmp.ne.s32.totalorder %s140, %s141
      %p152 = scmp.eq.s32.totalorder %s22, 0
      %p153 = por %p151, %p152
      %p154 = scmp.ne.s32.totalorder %s140, %s141
      %p155 = scmp.eq.s32.totalorder %s23, 1
      %p156 = por %p154, %p155
      %p158 = scmp.ne.s32.totalorder %s141, %s157
      %p159 = scmp.eq.s32.totalorder %s23, 0
      %p160 = por %p158, %p159
      %p161 = scmp.le.s32.totalorder 1, %s17
      %p162 = scmp.lt.s32.totalorder %s17, 3
      %p163 = pnand %p161, %p162
      %p164 = pneg %p163
      // Predicated region
      $region9: #{tpu_custom_call.1} parent=5 // pred_check
        _
      $region10: #{tpu_custom_call.1} parent=5 // pred_check_branch
        %166 = sbr.rel (%p163) target = $region12
      $region11: #{tpu_custom_call.1} parent=5 // pred_region
        %s167 = ssub.s32 %s17, 1
        // Predicated region
        $region13: #{tpu_custom_call.1} parent=11 // pred_check
          %p168 = pneg %p64
        $region14: #{tpu_custom_call.1} parent=11 // pred_check_branch
          %170 = sbr.rel (%p168) target = $region16
        $region15: #{tpu_custom_call.1} parent=11 // pred_region
          _
        $region16: #{tpu_custom_call.1} parent=11 // pred_fallthru
          _
        // Predicated region
        $region17: #{tpu_custom_call.1} parent=11 // pred_check
          %p171 = pneg %p85
        $region18: #{tpu_custom_call.1} parent=11 // pred_check_branch
          %173 = sbr.rel (%p171) target = $region20
        $region19: #{tpu_custom_call.1} parent=11 // pred_region
          _
        $region20: #{tpu_custom_call.1} parent=11 // pred_fallthru
          _
        // Predicated region
        $region21: #{tpu_custom_call.1} parent=11 // pred_check
          %p174 = pneg %p106
        $region22: #{tpu_custom_call.1} parent=11 // pred_check_branch
          %176 = sbr.rel (%p174) target = $region24
        $region23: #{tpu_custom_call.1} parent=11 // pred_region
          _
        $region24: #{tpu_custom_call.1} parent=11 // pred_fallthru
          _
        // Predicated region
        $region25: #{tpu_custom_call.1} parent=11 // pred_check
          %p177 = pneg %p127
        $region26: #{tpu_custom_call.1} parent=11 // pred_check_branch
          %179 = sbr.rel (%p177) target = $region28
        $region27: #{tpu_custom_call.1} parent=11 // pred_region
          _
        $region28: #{tpu_custom_call.1} parent=11 // pred_fallthru
          _
      $region12: #{tpu_custom_call.1} parent=5 // pred_fallthru
        _
      %p180 = scmp.lt.s32.totalorder %s17, 2
      // Predicated region
      $region29: #{tpu_custom_call.1} parent=5 // pred_check
        %p181 = pneg %p180
      $region30: #{tpu_custom_call.1} parent=5 // pred_check_branch
        %183 = sbr.rel (%p181) target = $region32
      $region31: #{tpu_custom_call.1} parent=5 // pred_region
        // Predicated region
        $region33: #{tpu_custom_call.1} parent=31 // pred_check
          %p184 = pneg %p37
        $region34: #{tpu_custom_call.1} parent=31 // pred_check_branch
          %186 = sbr.rel (%p184) target = $region36
        $region35: #{tpu_custom_call.1} parent=31 // pred_region
          %s187 = sand.u32 %s27, 1
          %s188 = scalar_lea.sflag [#allocation3], %s187
          %s189 = sand.u32 %s27, 1
          %s190 = smul.addr %s189, 16
          %s191 = scalar_lea.vmem [#allocation2], %s190
          %193 = vsyncadd %s188, 0
          %s194 = smul.addr %s17, 2
          %s195 = smul.addr %s194, 8
          %s196 = scalar_lea.hbm %s0, %s195
          %s198 = sshll.u32 %s196, 4
          %s199 = int_to_ptr.hbm [resolvable:$true] %s198
          %s200 = sshll.u32 %s191, 4
          %s201 = int_to_ptr.vmem [resolvable:$true] %s200
          %203 = dma.hbm_to_vmem [thread:$0]  %s199, 256, %s201, %s188
        $region36: #{tpu_custom_call.1} parent=31 // pred_fallthru
          _
      $region32: #{tpu_custom_call.1} parent=5 // pred_fallthru
        _
      %p204 = scmp.le.s32.totalorder 1, %s17
      %p205 = scmp.lt.s32.totalorder %s17, 3
      %p206 = pnand %p204, %p205
      %p207 = pneg %p206
      // Predicated region
      $region37: #{tpu_custom_call.1} parent=5 // pred_check
        _
      $region38: #{tpu_custom_call.1} parent=5 // pred_check_branch
        %209 = sbr.rel (%p206) target = $region40
      $region39: #{tpu_custom_call.1} parent=5 // pred_region
        %s210 = ssub.s32 %s17, 1
        %s211 = sand.u32 %s30, 1
        %s212 = scalar_lea.sflag [#allocation3], %s211
        %s213 = sand.u32 %s30, 1
        %s214 = smul.addr %s213, 16
        %s215 = scalar_lea.vmem [#allocation2], %s214
        // Predicated region
        $region41: #{tpu_custom_call.1} parent=39 // pred_check
          %p216 = pneg %p43
        $region42: #{tpu_custom_call.1} parent=39 // pred_check_branch
          %218 = sbr.rel (%p216) target = $region44
        $region43: #{tpu_custom_call.1} parent=39 // pred_region
          %220 = dma.done %s212, 256
        $region44: #{tpu_custom_call.1} parent=39 // pred_fallthru
          _
        %s221 = sand.u32 %s30, 1
        %s222 = scalar_lea.sflag [#allocation3], %s221
        %s223 = sand.u32 %s30, 1
        %s224 = smul.addr %s223, 16
        %s225 = scalar_lea.vmem [#allocation2], %s224
        %p226 = pneg %p43
        %p227 = pneg %p40
        %p228 = pneg %p64
        %p229 = pneg %p61
        %p230 = pneg %p85
        %p231 = pneg %p82
        %p232 = pneg %p106
        %p233 = pneg %p103
        %p234 = pneg %p127
        %p235 = pneg %p124
        %p236 = pneg %p153
        %p237 = pneg %p150
        %s238 = sand.u32 %s140, 1
        %s239 = scalar_lea.sflag [#allocation4], %s238
        %s240 = sand.u32 %s140, 1
        %s241 = smul.addr %s240, 16
        %s242 = scalar_lea.vmem [#allocation5], %s241
        %v243 = vld [vmem:[%s215] sm:$0xff]
        %v244 = vld [vmem:[%s215 + $0x8] sm:$0xff]
        %v245 = vadd.f32 %v243, %v244
        %246 = vadd.xlane.f32.xlu0 %v245
        %v247 = vpop.xlane.xlu0 %246
        %v248 = vmul.f32 %v247, 0.00390625
        %v249 = vld [vmem:[%s1] sm:$0xff]
        %v250 = vld [vmem:[%s2] sm:$0x1]
        %v252 = vlaneseq
        %v253 = vand.u32 %v252, 127
        %v254 = vperm.slane %v248, %v253
        %vm255 = vcmask 64512
        %v256 = vsel %vm255, %v254, 0
        %258 = vmatpush.msra.mxu0 0.0
        %259 = vmatpush.msra.mxu0 0.0
        %260 = vmatpush.msra.mxu0 0.0
        %261 = vmatpush.msra.mxu0 0.0
        %262 = vmatpush.msra.mxu0 0.0
        %263 = vmatpush.msra.mxu0 0.0
        %264 = vmatpush.msra.mxu0 0.0
        %265 = vmatpush.msra.mxu0 0.0
        %266 = vmatpush.msra.mxu0 0.0
        %267 = vmatpush.msra.mxu0 0.0
        %268 = vmatpush.msra.mxu0 0.0
        %269 = vmatpush.msra.mxu0 0.0
        %270 = vmatpush.msra.mxu0 0.0
        %271 = vmatpush.msra.mxu0 0.0
        %272 = vmatpush.msra.mxu0 0.0
        %273 = vmatpush.msra.mxu0 %v249
        %274 = vmatmul.f32.gmra.mxu0 %v256
        %v275 = vpop.f32.mrf.mxu0
        %v276 = vadd.f32 %v250, %v275
        %277 = vdwg.mxu0
        %v278 = vmax.f32 %v276, 0.0
        %v279 = vld [vmem:[%s3] sm:$0x3]
        %v280 = vld [vmem:[%s4] sm:$0x1]
        %vm281 = vcmask 15360
        %v283 = vsel %vm281, %v278, 0
        %vm285 = vcmask 1041408
        %v287 = vsel %vm285, %v279, 0
        %289 = vmatpush.msra.mxu0 0.0
        %290 = vmatpush.msra.mxu0 0.0
        %291 = vmatpush.msra.mxu0 0.0
        %292 = vmatpush.msra.mxu0 0.0
        %293 = vmatpush.msra.mxu0 0.0
        %294 = vmatpush.msra.mxu0 0.0
        %295 = vmatpush.msra.mxu0 0.0
        %296 = vmatpush.msra.mxu0 0.0
        %297 = vmatpush.msra.mxu0 0.0
        %298 = vmatpush.msra.mxu0 0.0
        %299 = vmatpush.msra.mxu0 0.0
        %300 = vmatpush.msra.mxu0 0.0
        %301 = vmatpush.msra.mxu0 0.0
        %302 = vmatpush.msra.mxu0 0.0
        %303 = vmatpush.msra.mxu0 0.0
        %304 = vmatpush.msra.mxu0 %v287
        %305 = vmatmul.f32.gmra.mxu0 %v283
        %v306 = vpop.f32.mrf.mxu0
        %v307 = vadd.f32 %v280, %v306
        %308 = vdwg.mxu0
        %v309 = vxor.u32 %v307, 2147483648
        %v310 = vmul.f32 %v309, 1.442695
        %v311 = vpow.pop %v310
        %v312 = vadd.f32 %v311, 1.0
        %v313 = vrcp.pop %v312
        %v314 = vmul.f32 %v312, %v313
        %v315 = vsub.f32 1.0, %v314
        %v316 = vmul.f32 %v313, %v315
        %v317 = vadd.f32 %v313, %v316
        %vm318 = vweird.f32 %v312
        %vm319 = vweird.f32 %v313
        %vm320 = vmor %vm318, %vm319
        %v321 = vsel %vm320, %v313, %v317
        %v322 = vand.u32 2147483647, %v312
        %vm323 = vcmp.eq.f32.partialorder %v322, 8.507059e+37
        %v324 = vand.u32 %v312, 2147483648
        %v325 = vor.u32 1.1754944e-38, %v324
        %v326 = vsel %vm323, %v325, %v321
        %v327 = vmul.f32 1.0, %v326
        %v328 = vperm.slane %v327, 0
        %v329 = vlaneseq
        %v330 = vshrl.u32 %v329, 7
        %332 = vset.pattern.permute.xlu0 %v330
        %333 = vperm.xlu0 %332, %v328
        %v334 = vpop.permute.xlu0 %333
        %v335 = vmul.f32 %v243, %v334
        %v336 = vmul.f32 %v244, %v334
        %337 = vst [vmem:[%s242] sm:$0xff] %v335
        %338 = vst [vmem:[%s242 + $0x8] sm:$0xff] %v336
        %s339 = sand.u32 %s140, 1
        %s340 = scalar_lea.sflag [#allocation4], %s339
        %s341 = sand.u32 %s140, 1
        %s342 = smul.addr %s341, 16
        %s343 = scalar_lea.vmem [#allocation5], %s342
        // Predicated region
        $region45: #{tpu_custom_call.1} parent=39 // pred_check
          %p344 = pneg %p150
        $region46: #{tpu_custom_call.1} parent=39 // pred_check_branch
          %346 = sbr.rel (%p344) target = $region48
        $region47: #{tpu_custom_call.1} parent=39 // pred_region
          %348 = vsyncadd %s340, 0
          %s349 = smul.addr %s22, 2
          %s350 = smul.addr %s349, 8
          %s351 = scalar_lea.hbm %s5, %s350
          %s353 = sshll.u32 %s343, 4
          %s354 = int_to_ptr.vmem [resolvable:$true] %s353
          %s355 = sshll.u32 %s351, 4
          %s356 = int_to_ptr.hbm [resolvable:$true] %s355
          %358 = dma.vmem_to_hbm [thread:$0]  %s354, 256, %s356, %s340
        $region48: #{tpu_custom_call.1} parent=39 // pred_fallthru
          _
      $region40: #{tpu_custom_call.1} parent=5 // pred_fallthru
        _
      %p359 = scmp.le.s32.totalorder 2, %s17
      // Predicated region
      $region49: #{tpu_custom_call.1} parent=5 // pred_check
        %p360 = pneg %p359
      $region50: #{tpu_custom_call.1} parent=5 // pred_check_branch
        %362 = sbr.rel (%p360) target = $region52
      $region51: #{tpu_custom_call.1} parent=5 // pred_region
        %s363 = ssub.s32 %s17, 2
        // Predicated region
        $region53: #{tpu_custom_call.1} parent=51 // pred_check
          %p364 = pneg %p156
        $region54: #{tpu_custom_call.1} parent=51 // pred_check_branch
          %366 = sbr.rel (%p364) target = $region56
        $region55: #{tpu_custom_call.1} parent=51 // pred_region
          %s367 = sand.u32 %s141, 1
          %s368 = scalar_lea.sflag [#allocation4], %s367
          %s369 = sand.u32 %s141, 1
          %s370 = smul.addr %s369, 16
          %s371 = scalar_lea.vmem [#allocation5], %s370
          %373 = dma.done %s368, 256
        $region56: #{tpu_custom_call.1} parent=51 // pred_fallthru
          _
      $region52: #{tpu_custom_call.1} parent=5 // pred_fallthru
        _
    $region6: #{tpu_custom_call.1} parent=1 // loop_footer
      %s21 = sadd.s32 1, %s17
    $region7: #{tpu_custom_call.1} parent=1 // loop_footer_branch
      %16 = sbr.rel target = $region3
    $region8: #{tpu_custom_call.1} parent=1 // loop_exit
      _
    %374 = vsyncpa [#allocation3], 1
    %s375 = scalar_lea.sflag [#allocation3], 1
    %376 = vsyncpa %s375, 1
    %377 = vsyncpa [#allocation4], 1
    %s378 = scalar_lea.sflag [#allocation4], 1
    %379 = vsyncpa %s378, 1

</llo_original>
